<compile_context>
chip_gen: v5e
topology: v5e:2x2
jax: 0.10.0
libtpu: 0.0.40
codegen_flags: <defaults>
</compile_context>

<pallas_src>
import jax
import jax.numpy as jnp
from jax.experimental import pallas as pl
from jax.experimental.pallas import tpu as pltpu

LENS = 4.0   # clamp threshold (thre=4 in ReLUX / lens=4 in multispike)
_LANE = 128


def _multispike_kernel(x_ref, o_ref):
    # Compute in f32 regardless of input dtype (correct rounding for bf16/fp8).
    x = x_ref[...].astype(jnp.float32)
    o_ref[...] = jnp.floor(jnp.clip(x, 0.0, LENS) + 0.5).astype(o_ref.dtype)


def _tpu_generation():
    """Best-effort TPU generation number (5, 6, 7, ...); None if unknown."""
    try:
        kind = jax.devices()[0].device_kind.lower()
    except Exception:
        return None
    if "tpu" not in kind:
        return None
    digits = "".join(c if c.isdigit() else " " for c in kind).split()
    if not digits:
        return None
    try:
        return int(digits[0])
    except ValueError:
        return None


def _block_target_bytes(gen):
    # v6e/v7x: 32 MiB scoped-VMEM default -> 4 MiB blocks (2 bufs x in+out = 16 MiB).
    # v5e / unknown: 16 MiB scoped default -> 2 MiB blocks (8 MiB double-buffered).
    if gen is not None and gen >= 6:
        return 4 * 1024 * 1024
    return 2 * 1024 * 1024


def _round_up(n, m):
    return pl.cdiv(n, m) * m


def _run_pallas_2d(x2d, *, donate=False):
    """Run the multispike kernel on a lane-dense (rows, 128) array."""
    rows, lane = x2d.shape
    dtype = x2d.dtype
    itemsize = jnp.dtype(dtype).itemsize
    # Sublane minimum depends on dtype packing (8 for f32, 16 for bf16, 32 for int8/fp8).
    sublane = max(8, 32 // max(itemsize, 1))
    gen = _tpu_generation()

    # --- byte-targeted tile sizing ------------------------------------------
    target_rows = max(sublane, _block_target_bytes(gen) // (lane * itemsize))
    tile_rows = min(_round_up(target_rows, sublane), _round_up(rows, sublane))

    steps = pl.cdiv(rows, tile_rows)
    if gen is not None and gen >= 7 and steps > 1 and steps % 2 == 1:
        # v7x megacore: keep an even number of grid steps so both TensorCores
        # stay busy on the last step.  Single-TC v5e/v6e keep the biggest block.
        tile_rows = min(_round_up(pl.cdiv(rows, steps + 1), sublane),
                        _round_up(rows, sublane))
        steps = pl.cdiv(rows, tile_rows)

    total = rows * lane
    cost = pl.CostEstimate(
        flops=4 * total,                       # clip + add + floor per element
        transcendentals=0,
        bytes_accessed=2 * total * itemsize,   # strictly read + write
    )

    return pl.pallas_call(
        _multispike_kernel,
        out_shape=jax.ShapeDtypeStruct((rows, lane), dtype),
        grid_spec=pl.GridSpec(
            grid=(steps,),  # ragged last block handled by Pallas (masked writes)
            in_specs=[pl.BlockSpec((tile_rows, lane), lambda i: (i, 0))],
            out_specs=pl.BlockSpec((tile_rows, lane), lambda i: (i, 0)),
        ),
        compiler_params=pltpu.CompilerParams(
            dimension_semantics=("parallel",),
        ),
        cost_estimate=cost,
        input_output_aliases=({0: 0} if donate else {}),
    )(x2d)


def _multispike_jnp(x):
    xf = x.astype(jnp.float32)
    return jnp.floor(jnp.clip(xf, 0.0, LENS) + 0.5).astype(x.dtype)


def multispike_forward(x, *, donate_input=False):
    """Forward pass of Multispike (lens=4). x: any-shape float array (e.g. NCHW)."""
    orig_shape = x.shape
    total = x.size
    if total == 0:
        return x

    aligned = (total // _LANE) * _LANE

    if aligned == total:
        # Fast path (typical conv activations): pure reshape in/out, zero copies.
        x2d = x.reshape(total // _LANE, _LANE)
        return _run_pallas_2d(x2d, donate=donate_input).reshape(orig_shape)

    if aligned == 0:
        # Tiny tensor (< 128 elements): not worth a kernel launch.
        return _multispike_jnp(x)

    # Ragged path: kernel on the lane-aligned head, plain jnp on the <128-element
    # tail.  Avoids the old full-array pad copy and full-array output slice.
    x_flat = x.reshape(-1)
    head = _run_pallas_2d(x_flat[:aligned].reshape(aligned // _LANE, _LANE))
    tail = _multispike_jnp(x_flat[aligned:])
    return jnp.concatenate([head.reshape(-1), tail]).reshape(orig_shape)


def _ref(x):
    return jnp.floor(jnp.clip(x.astype(jnp.float32), 0.0, 4.0) + 0.5).astype(x.dtype)


if __name__ == "__main__":
    key = jax.random.PRNGKey(0)

    # 1) NCHW activation-style tensor, lane-aligned fast path (f32).
    x = jax.random.normal(key, (2, 4, 16, 16), dtype=jnp.float32) * 3.0
    y = multispike_forward(x)
    jax.block_until_ready(y)
    assert y.shape == x.shape and y.dtype == x.dtype
    assert bool(jnp.all(y == _ref(x)))

    # 2) Same tensor in bf16 (exercises the f32 upcast / rounding path).
    x_bf = x.astype(jnp.bfloat16)
    y_bf = multispike_forward(x_bf)
    jax.block_until_ready(y_bf)
    assert y_bf.dtype == jnp.bfloat16
    assert bool(jnp.all(y_bf == _ref(x_bf)))

    # 3) Ragged size > 128: aligned head via Pallas + jnp tail.
    x_rag = jax.random.normal(jax.random.PRNGKey(1), (3, 5, 9), dtype=jnp.float32) * 3.0
    y_rag = multispike_forward(x_rag)
    jax.block_until_ready(y_rag)
    assert bool(jnp.all(y_rag == _ref(x_rag)))

    # 4) Tiny size < 128: pure-jnp fallback.
    x_tiny = jax.random.normal(jax.random.PRNGKey(2), (3, 5, 7), dtype=jnp.float32) * 3.0
    y_tiny = multispike_forward(x_tiny)
    jax.block_until_ready(y_tiny)
    assert bool(jnp.all(y_tiny == _ref(x_tiny)))

    print("KERNEL_OK")
</pallas_src>

<mosaic_0001>
module attributes {stable_mosaic.version = 11 : i64} {
  func.func @_multispike_kernel(%arg0: i32, %arg1: memref<16x128xf32, #tpu.memory_space<vmem>>, %arg2: memref<16x128xf32, #tpu.memory_space<vmem>>) attributes {dimension_semantics = [#tpu.dimension_semantics<parallel>], iteration_bounds = array<i64: 1>, scalar_prefetch = 0 : i64, scratch_operands = 0 : i64, tpu.core_type = #tpu.core_type<tc>, window_params = [{transform_indices = @transform_0, window_bounds = array<i64: 16, 128>}, {transform_indices = @transform_1, window_bounds = array<i64: 16, 128>}]} {
    %c0 = arith.constant 0 : index
    %c0_0 = arith.constant 0 : index
    %0 = vector.load %arg1[%c0, %c0_0] : memref<16x128xf32, #tpu.memory_space<vmem>>, vector<16x128xf32>
    %cst = arith.constant 0.000000e+00 : f32
    %cst_1 = arith.constant 4.000000e+00 : f32
    %1 = vector.broadcast %cst : f32 to vector<16x128xf32>
    %2 = arith.maximumf %1, %0 : vector<16x128xf32>
    %3 = vector.broadcast %cst_1 : f32 to vector<16x128xf32>
    %4 = arith.minimumf %3, %2 : vector<16x128xf32>
    %cst_2 = arith.constant 5.000000e-01 : f32
    %5 = vector.broadcast %cst_2 : f32 to vector<16x128xf32>
    %6 = arith.addf %4, %5 : vector<16x128xf32>
    %7 = math.floor %6 : vector<16x128xf32>
    %c0_3 = arith.constant 0 : index
    %c0_4 = arith.constant 0 : index
    %8 = vector.load %arg2[%c0_3, %c0_4] : memref<16x128xf32, #tpu.memory_space<vmem>>, vector<16x128xf32>
    tpu.vector_store %arg2[%c0_3, %c0_4], %7 {strides = array<i32>} : memref<16x128xf32, #tpu.memory_space<vmem>>, vector<16x128xf32>,
    return
  }
  func.func @transform_0(%arg0: i32) -> (i32, i32) {
    %c0_i32 = arith.constant 0 : i32
    %c0_i32_0 = arith.constant 0 : i32
    return %arg0, %c0_i32 : i32, i32
  }
  func.func @transform_1(%arg0: i32) -> (i32, i32) {
    %c0_i32 = arith.constant 0 : i32
    %c0_i32_0 = arith.constant 0 : i32
    return %arg0, %c0_i32 : i32, i32
  }
}

</mosaic_0001>

<llo_original>
// kernel: tpu_custom_call.1
$region0: #{tpu_custom_call.1}
  #allocation0 [shape = 'u32[]', space=smem, size = 0x4, offset = 0x4, fixed_abs, tag = 'smem constant byte address 0x4 - core index']
  #allocation1 [shape = 'u32[72,128]{1,0:T(1,128)}', space=vmem, size = 0x9000, scoped, tag = 'internal scratch']
  %s0 = inlined_call_operand.hbm [shape: f32[16,128], index: 0, kind: input, shape index: {}]
  %s1 = inlined_call_operand.hbm [shape: f32[16,128], index: 1, kind: output, shape index: {}]
  %s2 = sld [smem:[#allocation0]]
  $region18: #{tpu_custom_call.1} parent=0
    _
  %s4 = ssub.s32 1, %s2
  %s5 = scalar_select 0, %s4, %s2
  $region1: #{tpu_custom_call.1} parent=0
    #allocation2 [shape = 'u8[8192]{0}', space=vmem, size = 0x2000, scoped, tag = 'input window, operand 0, single buffered']
    #allocation3 [shape = 's32[1]{0}', space=sflag, size = 0x4, scoped, tag = 'scoped memory for tpu_custom_call.1']
    #allocation4 [shape = 's32[1]{0}', space=sflag, size = 0x4, scoped, tag = 'scoped memory for tpu_custom_call.1']
    #allocation5 [shape = 'u8[8192]{0}', space=vmem, size = 0x2000, scoped, tag = 'output window, operand 0, single buffered']
    %6 = vsyncpa [#allocation3], 0
    %7 = vsyncpa [#allocation4], 0
    // Predicated region
    $region2: #{tpu_custom_call.1} parent=1 // pred_check
      _
    $region3: #{tpu_custom_call.1} parent=1 // pred_check_branch
      %9 = sbr.rel (0) target = $region5
    $region4: #{tpu_custom_call.1} parent=1 // pred_region
      %11 = vsyncadd [#allocation3], 0
      %s12 = sshll.u32 %s0, 4
      %s13 = int_to_ptr.hbm [resolvable:$true] %s12
      %s14 = sshll.u32 [#allocation2], 4
      %s15 = int_to_ptr.vmem [resolvable:$true] %s14
      %20 = dma.hbm_to_vmem [thread:$0]  %s13, 256, %s15, [#allocation3], 128, 128, 8
    $region5: #{tpu_custom_call.1} parent=1 // pred_fallthru
      _
    // Predicated region
    $region6: #{tpu_custom_call.1} parent=1 // pred_check
      _
    $region7: #{tpu_custom_call.1} parent=1 // pred_check_branch
      %22 = sbr.rel (0) target = $region9
    $region8: #{tpu_custom_call.1} parent=1 // pred_region
      %24 = dma.done [#allocation3], 256
    $region9: #{tpu_custom_call.1} parent=1 // pred_fallthru
      _
    %v25 = vld [vmem:[#allocation2] sm:$0xff]
    %v26 = vld [vmem:[#allocation2 + $0x8] sm:$0xff]
    %v27 = vmax.f32 %v25, 0.0
    %v28 = vmax.f32 %v26, 0.0
    %v29 = vmin.f32 %v27, 4.0
    %v30 = vmin.f32 %v28, 4.0
    %v31 = vadd.f32 %v29, 0.5
    %v32 = vadd.f32 %v30, 0.5
    %v33 = vfloor.f32 %v31
    %v34 = vfloor.f32 %v32
    %35 = vst [vmem:[#allocation5] sm:$0xff] %v33
    %36 = vst [vmem:[#allocation5 + $0x8] sm:$0xff] %v34
    // Predicated region
    $region10: #{tpu_custom_call.1} parent=1 // pred_check
      _
    $region11: #{tpu_custom_call.1} parent=1 // pred_check_branch
      %38 = sbr.rel (0) target = $region13
    $region12: #{tpu_custom_call.1} parent=1 // pred_region
      %40 = vsyncadd [#allocation4], 0
      %s41 = sshll.u32 [#allocation5], 4
      %s42 = int_to_ptr.vmem [resolvable:$true] %s41
      %s43 = sshll.u32 %s1, 4
      %s44 = int_to_ptr.hbm [resolvable:$true] %s43
      %49 = dma.vmem_to_hbm [thread:$0]  %s42, 256, %s44, [#allocation4], 128, 128, 8
    $region13: #{tpu_custom_call.1} parent=1 // pred_fallthru
      _
    // Predicated region
    $region14: #{tpu_custom_call.1} parent=1 // pred_check
      _
    $region15: #{tpu_custom_call.1} parent=1 // pred_check_branch
      %51 = sbr.rel (0) target = $region17
    $region16: #{tpu_custom_call.1} parent=1 // pred_region
      %53 = dma.done [#allocation4], 256
    $region17: #{tpu_custom_call.1} parent=1 // pred_fallthru
      _
    %54 = vsyncpa [#allocation3], 1
    %55 = vsyncpa [#allocation4], 1

</llo_original>
